<compile_context>
chip_gen: v5e
topology: v5e:2x2
jax: 0.10.0
libtpu: 0.0.40
codegen_flags: <defaults>
</compile_context>

<pallas_src>
import jax
import jax.numpy as jnp
from jax.experimental import pallas as pl
from jax.experimental.pallas import tpu as pltpu

LANE = 128


def _round_up(x: int, m: int) -> int:
    return (x + m - 1) // m * m


def sentence_encoder_kernel(ids_ref, emb_ref, w_ref, b_ref, o_ref):
    """One N-tile: one-hot MXU gather + fused gated projection.

    ids_ref : VMEM (TM, 1) int32        (token ids for this tile)
    emb_ref : VMEM (Vpad, Dpad) bf16    (resident across grid, zero-padded)
    w_ref   : VMEM (Dpad, 2*Dpad) bf16  ([W1^T | W2^T], 128-lane-aligned halves, resident)
    b_ref   : VMEM (1, 2*Dpad) f32      ([b1 | b2], resident)
    o_ref   : VMEM (TM, Dpad) f32       (lane-dense output tile)
    """
    tm, dp = o_ref.shape
    vpad = emb_ref.shape[0]

    ids = ids_ref[...]                                              # (tm, 1) int32
    # --- Embedding gather on the MXU: onehot[r, v] = (v == ids[r]) ------------------
    col = jax.lax.broadcasted_iota(jnp.int32, (tm, vpad), 1)
    onehot = (col == ids).astype(jnp.bfloat16)                      # (tm, Vpad)
    x = jnp.dot(onehot, emb_ref[...], preferred_element_type=jnp.float32)  # (tm, Dpad)

    # TODO(synk): nn.Dropout(0.1) is identity here (eval-mode / deterministic forward).

    # --- NewProjModule, fused: z = x @ [W1^T|W2^T] + [b1|b2]; out = sigmoid(z1)*tanh(z2)
    z = jnp.dot(x.astype(jnp.bfloat16), w_ref[...],
                preferred_element_type=jnp.float32) + b_ref[...]    # (tm, 2*Dpad)
    i = jax.nn.sigmoid(z[:, :dp])                                   # lane-aligned split
    u = jnp.tanh(z[:, dp:])
    o_ref[...] = (i * u).astype(o_ref.dtype)


def sentence_encoder(ids, emb, w1, b1, w2, b2, *, block_rows=1024):
    """ids: [B, S] int; emb: [V, D]; w1/w2: [D, D] (PyTorch out,in layout); b1/b2: [D]."""
    B, S = ids.shape
    V, D = emb.shape
    N = B * S

    d_pad = _round_up(D, LANE)          # K and output lane dims, 128-aligned
    v_pad = _round_up(V, LANE)          # one-hot lane dim / table sublane dim

    block_rows = max(8, _round_up(block_rows, 8))
    tm = min(block_rows, _round_up(N, 8))
    n_pad = _round_up(N, tm)
    grid = (n_pad // tm,)
    # TODO(synk): on v7x prefer >=2 row tiles (or CORE_PARALLEL) so both TensorCores work;
    #             on single-core v5e/v6e the fewest, largest tiles win (default here).

    # Token ids: clamp (untrusted inputs would silently mis-gather), flatten, pad,
    # and reshape to a (n_pad, 1) column so each tile gets a (tm, 1) VMEM block.
    ids_flat = jnp.clip(ids.reshape(N).astype(jnp.int32), 0, V - 1)
    ids_col = jnp.zeros((n_pad, 1), jnp.int32).at[:N, 0].set(ids_flat)

    # Embedding table: bf16, zero-padded to (Vpad, Dpad) -> both gather operands lane-dense.
    emb_p = jnp.zeros((v_pad, d_pad), jnp.bfloat16).at[:V, :D].set(emb.astype(jnp.bfloat16))

    # Fused projection: lanes [0,128) = W1^T (sigmoid path), [128,256) = W2^T (tanh path).
    w_fused = jnp.zeros((d_pad, 2 * d_pad), jnp.bfloat16)
    w_fused = w_fused.at[:D, :D].set(jnp.transpose(w1).astype(jnp.bfloat16))
    w_fused = w_fused.at[:D, d_pad:d_pad + D].set(jnp.transpose(w2).astype(jnp.bfloat16))
    b_fused = jnp.zeros((1, 2 * d_pad), jnp.float32)
    b_fused = b_fused.at[0, :D].set(b1.astype(jnp.float32))
    b_fused = b_fused.at[0, d_pad:d_pad + D].set(b2.astype(jnp.float32))

    cost = pl.CostEstimate(
        flops=2 * n_pad * v_pad * d_pad           # one-hot gather matmul
              + 2 * n_pad * d_pad * (2 * d_pad),  # fused projection
        transcendentals=2 * n_pad * d_pad,
        bytes_accessed=(n_pad * 4                 # ids
                        + v_pad * d_pad * 2       # bf16 embedding table
                        + d_pad * 2 * d_pad * 2   # fused bf16 weights
                        + 2 * d_pad * 4           # fused bias
                        + n_pad * d_pad * 4),     # output
    )

    out = pl.pallas_call(
        sentence_encoder_kernel,
        out_shape=jax.ShapeDtypeStruct((n_pad, d_pad), jnp.float32),
        grid_spec=pltpu.PrefetchScalarGridSpec(
            num_scalar_prefetch=0,
            grid=grid,
            in_specs=[
                pl.BlockSpec((tm, 1), lambda i: (i, 0)),             # ids column (per tile)
                pl.BlockSpec((v_pad, d_pad), lambda i: (0, 0)),      # emb (resident)
                pl.BlockSpec((d_pad, 2 * d_pad), lambda i: (0, 0)),  # fused weights (resident)
                pl.BlockSpec((1, 2 * d_pad), lambda i: (0, 0)),      # fused bias (resident)
            ],
            out_specs=pl.BlockSpec((tm, d_pad), lambda i: (i, 0)),
        ),
        compiler_params=pltpu.CompilerParams(
            dimension_semantics=("parallel",),
        ),
        cost_estimate=cost,
    )(ids_col, emb_p, w_fused, b_fused)

    return out[:N, :D].reshape(B, S, D)


def reference(ids, emb, w1, b1, w2, b2):
    x = emb[ids]                                          # (B, S, D)
    i = jax.nn.sigmoid(x @ w1.T + b1)
    u = jnp.tanh(x @ w2.T + b2)
    return i * u


if __name__ == "__main__":
    # Shapes consistent with the module: dim_word = 50 (Config), small vocab / batch / seq.
    B, S, V, D = 2, 8, 100, 50

    key = jax.random.PRNGKey(0)
    k_ids, k_emb, k_w1, k_b1, k_w2, k_b2 = jax.random.split(key, 6)

    ids = jax.random.randint(k_ids, (B, S), 0, V, dtype=jnp.int32)

    # Embedding table with padding_idx=0 row zeroed (nn.Embedding semantics).
    emb = jax.random.normal(k_emb, (V, D), dtype=jnp.float32) * 0.1
    emb = emb.at[0].set(0.0)

    # nn.Linear default init: U(-1/sqrt(in), 1/sqrt(in)), weight layout (out, in).
    bound = 1.0 / jnp.sqrt(jnp.float32(D))
    w1 = jax.random.uniform(k_w1, (D, D), jnp.float32, -bound, bound)
    b1 = jax.random.uniform(k_b1, (D,), jnp.float32, -bound, bound)
    w2 = jax.random.uniform(k_w2, (D, D), jnp.float32, -bound, bound)
    b2 = jax.random.uniform(k_b2, (D,), jnp.float32, -bound, bound)

    # block_rows=8 -> 2 row-tiles, exercises the pipelined grid even at toy size.
    out = sentence_encoder(ids, emb, w1, b1, w2, b2, block_rows=8)
    out = jax.block_until_ready(out)

    ref = reference(ids, emb, w1, b1, w2, b2)
    assert out.shape == (B, S, D)
    max_err = float(jnp.max(jnp.abs(out - ref)))
    # bf16 table/weights with f32 accumulation: ~1e-3-level agreement vs f32 reference.
    assert jnp.allclose(out, ref, atol=1e-2, rtol=1e-2), f"max abs err {max_err}"

    print("KERNEL_OK")
</pallas_src>

<mosaic_0001>
module attributes {stable_mosaic.version = 11 : i64} {
  func.func @sentence_encoder_kernel(%arg0: i32, %arg1: memref<8x1xi32, #tpu.memory_space<vmem>>, %arg2: memref<128x128xbf16, #tpu.memory_space<vmem>>, %arg3: memref<128x256xbf16, #tpu.memory_space<vmem>>, %arg4: memref<1x256xf32, #tpu.memory_space<vmem>>, %arg5: memref<8x128xf32, #tpu.memory_space<vmem>>) attributes {dimension_semantics = [#tpu.dimension_semantics<parallel>], iteration_bounds = array<i64: 2>, scalar_prefetch = 0 : i64, scratch_operands = 0 : i64, tpu.core_type = #tpu.core_type<tc>, window_params = [{transform_indices = @transform_0, window_bounds = array<i64: 8, 1>}, {pipeline_mode = #tpu.pipeline_mode<synchronous>, transform_indices = @transform_1, window_bounds = array<i64: 128, 128>}, {pipeline_mode = #tpu.pipeline_mode<synchronous>, transform_indices = @transform_2, window_bounds = array<i64: 128, 256>}, {pipeline_mode = #tpu.pipeline_mode<synchronous>, transform_indices = @transform_3, window_bounds = array<i64: 1, 256>}, {transform_indices = @transform_4, window_bounds = array<i64: 8, 128>}]} {
    %c0 = arith.constant 0 : index
    %c0_0 = arith.constant 0 : index
    %0 = vector.load %arg1[%c0, %c0_0] : memref<8x1xi32, #tpu.memory_space<vmem>>, vector<8x1xi32>
    %1 = tpu.iota {dimensions = array<i32: 1>} : vector<8x128xi32>
    %2 = vector.broadcast %0 : vector<8x1xi32> to vector<8x128xi32>
    %3 = arith.cmpi eq, %1, %2 : vector<8x128xi32>
    %4 = arith.extui %3 : vector<8x128xi1> to vector<8x128xi32>
    %5 = arith.sitofp %4 : vector<8x128xi32> to vector<8x128xf32>
    %6 = arith.truncf %5 : vector<8x128xf32> to vector<8x128xbf16>
    %c0_1 = arith.constant 0 : index
    %c0_2 = arith.constant 0 : index
    %7 = vector.load %arg2[%c0_1, %c0_2] : memref<128x128xbf16, #tpu.memory_space<vmem>>, vector<128x128xbf16>
    %cst = arith.constant dense<0.000000e+00> : vector<8x128xf32>
    %8 = tpu.matmul %6, %7, %cst {dimension_numbers = #tpu.dot_dimension_numbers<[1], [0], [0], [1], [0, 0, 1, 1], [], []>} : vector<8x128xbf16>, vector<128x128xbf16>, vector<8x128xf32> -> vector<8x128xf32>
    %9 = arith.truncf %8 : vector<8x128xf32> to vector<8x128xbf16>
    %c0_3 = arith.constant 0 : index
    %c0_4 = arith.constant 0 : index
    %10 = vector.load %arg3[%c0_3, %c0_4] : memref<128x256xbf16, #tpu.memory_space<vmem>>, vector<128x256xbf16>
    %cst_5 = arith.constant dense<0.000000e+00> : vector<8x256xf32>
    %11 = tpu.matmul %9, %10, %cst_5 {dimension_numbers = #tpu.dot_dimension_numbers<[1], [0], [0], [1], [0, 0, 1, 1], [], []>} : vector<8x128xbf16>, vector<128x256xbf16>, vector<8x256xf32> -> vector<8x256xf32>
    %c0_6 = arith.constant 0 : index
    %c0_7 = arith.constant 0 : index
    %12 = vector.load %arg4[%c0_6, %c0_7] : memref<1x256xf32, #tpu.memory_space<vmem>>, vector<1x256xf32>
    %13 = vector.broadcast %12 : vector<1x256xf32> to vector<8x256xf32>
    %14 = arith.addf %11, %13 : vector<8x256xf32>
    %15 = vector.extract_strided_slice %14 {offsets = [0, 0], sizes = [8, 128], strides = [1, 1]} : vector<8x256xf32> to vector<8x128xf32>
    %16 = arith.negf %15 : vector<8x128xf32>
    %17 = math.exp %16 : vector<8x128xf32>
    %cst_8 = arith.constant 1.000000e+00 : f32
    %18 = vector.broadcast %cst_8 : f32 to vector<8x128xf32>
    %19 = arith.addf %18, %17 : vector<8x128xf32>
    %20 = arith.divf %18, %19 : vector<8x128xf32>
    %21 = vector.extract_strided_slice %14 {offsets = [0, 128], sizes = [8, 128], strides = [1, 1]} : vector<8x256xf32> to vector<8x128xf32>
    %22 = math.tanh %21 : vector<8x128xf32>
    %23 = arith.mulf %20, %22 : vector<8x128xf32>
    %c0_9 = arith.constant 0 : index
    %c0_10 = arith.constant 0 : index
    %24 = vector.load %arg5[%c0_9, %c0_10] : memref<8x128xf32, #tpu.memory_space<vmem>>, vector<8x128xf32>
    tpu.vector_store %arg5[%c0_9, %c0_10], %23 {strides = array<i32>} : memref<8x128xf32, #tpu.memory_space<vmem>>, vector<8x128xf32>,
    return
  }
  func.func @transform_0(%arg0: i32) -> (i32, i32) {
    %c0_i32 = arith.constant 0 : i32
    %c0_i32_0 = arith.constant 0 : i32
    return %arg0, %c0_i32 : i32, i32
  }
  func.func @transform_1(%arg0: i32) -> (i32, i32) {
    %c0_i32 = arith.constant 0 : i32
    %c0_i32_0 = arith.constant 0 : i32
    %c0_i32_1 = arith.constant 0 : i32
    return %c0_i32, %c0_i32_0 : i32, i32
  }
  func.func @transform_2(%arg0: i32) -> (i32, i32) {
    %c0_i32 = arith.constant 0 : i32
    %c0_i32_0 = arith.constant 0 : i32
    %c0_i32_1 = arith.constant 0 : i32
    return %c0_i32, %c0_i32_0 : i32, i32
  }
  func.func @transform_3(%arg0: i32) -> (i32, i32) {
    %c0_i32 = arith.constant 0 : i32
    %c0_i32_0 = arith.constant 0 : i32
    %c0_i32_1 = arith.constant 0 : i32
    return %c0_i32, %c0_i32_0 : i32, i32
  }
  func.func @transform_4(%arg0: i32) -> (i32, i32) {
    %c0_i32 = arith.constant 0 : i32
    %c0_i32_0 = arith.constant 0 : i32
    return %arg0, %c0_i32 : i32, i32
  }
}

</mosaic_0001>

<llo_original>
// kernel: tpu_custom_call.1
$region0: #{tpu_custom_call.1}
  #allocation0 [shape = 'u32[]', space=smem, size = 0x4, offset = 0x4, fixed_abs, tag = 'smem constant byte address 0x4 - core index']
  #allocation1 [shape = 'u32[72,128]{1,0:T(1,128)}', space=vmem, size = 0x9000, scoped, tag = 'internal scratch']
  %s0 = inlined_call_operand.vmem [shape: s32[16,1], index: 0, kind: input, shape index: {}]
  %s1 = inlined_call_operand.hbm [shape: bf16[128,128], index: 1, kind: input, shape index: {}]
  %s2 = inlined_call_operand.hbm [shape: bf16[128,256], index: 2, kind: input, shape index: {}]
  %s3 = inlined_call_operand.vmem [shape: f32[1,256], index: 3, kind: input, shape index: {}]
  %s4 = inlined_call_operand.hbm [shape: f32[16,128], index: 4, kind: output, shape index: {}]
  %s5 = sld [smem:[#allocation0]]
  $region57: #{tpu_custom_call.1} parent=0
    _
  %s7 = ssub.s32 1, %s5
  %s8 = scalar_select 0, %s7, %s5
  $region1: #{tpu_custom_call.1} parent=0
    #allocation2 [shape = 'u8[32768]{0}', space=vmem, size = 0x8000, scoped, tag = 'input window, operand 1, single buffered']
    #allocation3 [shape = 's32[2]{0}', space=sflag, size = 0x8, scoped, tag = 'scoped memory for tpu_custom_call.1']
    #allocation4 [shape = 's32[2]{0}', space=sflag, size = 0x8, scoped, tag = 'scoped memory for tpu_custom_call.1']
    #allocation5 [shape = 'u8[65536]{0}', space=vmem, size = 0x10000, scoped, tag = 'input window, operand 2, single buffered']
    #allocation6 [shape = 's32[1]{0}', space=sflag, size = 0x4, scoped, tag = 'scoped memory for tpu_custom_call.1']
    #allocation7 [shape = 'u8[8192]{0}', space=vmem, size = 0x2000, scoped, tag = 'output window, operand 0']
    %9 = vsyncpa [#allocation3], 0
    %10 = vsyncpa [#allocation6], 0
    %11 = vsyncpa [#allocation4], 0
    %s12 = scalar_lea.sflag [#allocation4], 1
    %13 = vsyncpa %s12, 0
    loop: start=0, step=1, limit=4
    $region2: #{tpu_custom_call.1} parent=1 // loop_pre_header
      _
    $region3: #{tpu_custom_call.1} parent=1 // loop_header
      %s15 = sphi 0, %s19
      %p16 = scmp.ge.s32.totalorder %s15, 4
      %s25 = sphi 0, %s27
      %s28 = sphi 0, %s25
      %s29 = sphi 0, %s28
      %s45 = sphi 0, %s29
      %s49 = sphi 0, %s49
      %s51 = sphi 0, %s49
      %s52 = sphi 0, %s51
      %s66 = sphi 0, %s52
      %s70 = sphi 0, %s70
      %s72 = sphi 0, %s70
      %s73 = sphi 0, %s72
      %s87 = sphi 0, %s73
      %s91 = sphi 0, %s91
      %s93 = sphi 0, %s91
      %s94 = sphi 0, %s93
      %s108 = sphi 0, %s94
      %s114 = sphi 0, %s116
      %s117 = sphi 0, %s114
      %s118 = sphi 0, %s117
      %s134 = sphi 0, %s118
    $region4: #{tpu_custom_call.1} parent=1 // loop_header_branch
      %18 = sbr.rel (%p16) target = $region8
    $region5: #{tpu_custom_call.1} parent=1 // loop_body
      %s20 = ssub.s32 %s15, 1
      %s21 = ssub.s32 %s15, 2
      %s22 = sadd.s32 %s15, 1
      %s23 = ssub.s32 %s15, %s22
      %p24 = scmp.eq.s32.totalorder %s23, 0
      %s26 = sadd.s32 %s25, 1
      %s27 = scalar_select %p24, %s25, %s26
      %p30 = pneg %p24
      %p31 = scmp.eq.s32.totalorder %s15, 1
      %p32 = por %p30, %p31
      %p33 = scmp.ne.s32.totalorder %s25, %s28
      %p34 = scmp.eq.s32.totalorder %s15, 0
      %p35 = por %p33, %p34
      %p36 = scmp.ne.s32.totalorder %s25, %s28
      %p37 = scmp.eq.s32.totalorder %s20, 1
      %p38 = por %p36, %p37
      %p39 = scmp.ne.s32.totalorder %s28, %s29
      %p40 = scmp.eq.s32.totalorder %s20, 0
      %p41 = por %p39, %p40
      %p42 = scmp.ne.s32.totalorder %s28, %s29
      %p43 = scmp.eq.s32.totalorder %s21, 1
      %p44 = por %p42, %p43
      %p46 = scmp.ne.s32.totalorder %s29, %s45
      %p47 = scmp.eq.s32.totalorder %s21, 0
      %p48 = por %p46, %p47
      %s50 = sadd.s32 %s49, 1
      %p53 = scmp.eq.s32.totalorder %s15, 1
      %p54 = scmp.ne.s32.totalorder %s49, %s51
      %p55 = scmp.eq.s32.totalorder %s15, 0
      %p56 = por %p54, %p55
      %p57 = scmp.ne.s32.totalorder %s49, %s51
      %p58 = scmp.eq.s32.totalorder %s20, 1
      %p59 = por %p57, %p58
      %p60 = scmp.ne.s32.totalorder %s51, %s52
      %p61 = scmp.eq.s32.totalorder %s20, 0
      %p62 = por %p60, %p61
      %p63 = scmp.ne.s32.totalorder %s51, %s52
      %p64 = scmp.eq.s32.totalorder %s21, 1
      %p65 = por %p63, %p64
      %p67 = scmp.ne.s32.totalorder %s52, %s66
      %p68 = scmp.eq.s32.totalorder %s21, 0
      %p69 = por %p67, %p68
      %s71 = sadd.s32 %s70, 1
      %p74 = scmp.eq.s32.totalorder %s15, 1
      %p75 = scmp.ne.s32.totalorder %s70, %s72
      %p76 = scmp.eq.s32.totalorder %s15, 0
      %p77 = por %p75, %p76
      %p78 = scmp.ne.s32.totalorder %s70, %s72
      %p79 = scmp.eq.s32.totalorder %s20, 1
      %p80 = por %p78, %p79
      %p81 = scmp.ne.s32.totalorder %s72, %s73
      %p82 = scmp.eq.s32.totalorder %s20, 0
      %p83 = por %p81, %p82
      %p84 = scmp.ne.s32.totalorder %s72, %s73
      %p85 = scmp.eq.s32.totalorder %s21, 1
      %p86 = por %p84, %p85
      %p88 = scmp.ne.s32.totalorder %s73, %s87
      %p89 = scmp.eq.s32.totalorder %s21, 0
      %p90 = por %p88, %p89
      %s92 = sadd.s32 %s91, 1
      %p95 = scmp.eq.s32.totalorder %s15, 1
      %p96 = scmp.ne.s32.totalorder %s91, %s93
      %p97 = scmp.eq.s32.totalorder %s15, 0
      %p98 = por %p96, %p97
      %p99 = scmp.ne.s32.totalorder %s91, %s93
      %p100 = scmp.eq.s32.totalorder %s20, 1
      %p101 = por %p99, %p100
      %p102 = scmp.ne.s32.totalorder %s93, %s94
      %p103 = scmp.eq.s32.totalorder %s20, 0
      %p104 = por %p102, %p103
      %p105 = scmp.ne.s32.totalorder %s93, %s94
      %p106 = scmp.eq.s32.totalorder %s21, 1
      %p107 = por %p105, %p106
      %p109 = scmp.ne.s32.totalorder %s94, %s108
      %p110 = scmp.eq.s32.totalorder %s21, 0
      %p111 = por %p109, %p110
      %s112 = ssub.s32 %s15, %s22
      %p113 = scmp.eq.s32.totalorder %s112, 0
      %s115 = sadd.s32 %s114, 1
      %s116 = scalar_select %p113, %s114, %s115
      %p119 = pneg %p113
      %p120 = scmp.eq.s32.totalorder %s15, 1
      %p121 = por %p119, %p120
      %p122 = scmp.ne.s32.totalorder %s114, %s117
      %p123 = scmp.eq.s32.totalorder %s15, 0
      %p124 = por %p122, %p123
      %p125 = scmp.ne.s32.totalorder %s114, %s117
      %p126 = scmp.eq.s32.totalorder %s20, 1
      %p127 = por %p125, %p126
      %p128 = scmp.ne.s32.totalorder %s117, %s118
      %p129 = scmp.eq.s32.totalorder %s20, 0
      %p130 = por %p128, %p129
      %p131 = scmp.ne.s32.totalorder %s117, %s118
      %p132 = scmp.eq.s32.totalorder %s21, 1
      %p133 = por %p131, %p132
      %p135 = scmp.ne.s32.totalorder %s118, %s134
      %p136 = scmp.eq.s32.totalorder %s21, 0
      %p137 = por %p135, %p136
      %p138 = scmp.le.s32.totalorder 1, %s15
      %p139 = scmp.lt.s32.totalorder %s15, 3
      %p140 = pnand %p138, %p139
      %p141 = pneg %p140
      // Predicated region
      $region9: #{tpu_custom_call.1} parent=5 // pred_check
        _
      $region10: #{tpu_custom_call.1} parent=5 // pred_check_branch
        %143 = sbr.rel (%p140) target = $region12
      $region11: #{tpu_custom_call.1} parent=5 // pred_region
        %s144 = ssub.s32 %s15, 1
        // Predicated region
        $region13: #{tpu_custom_call.1} parent=11 // pred_check
          %p145 = pneg %p62
        $region14: #{tpu_custom_call.1} parent=11 // pred_check_branch
          %147 = sbr.rel (%p145) target = $region16
        $region15: #{tpu_custom_call.1} parent=11 // pred_region
          %149 = vsyncadd [#allocation3], 0
          %s150 = sshll.u32 %s1, 4
          %s151 = int_to_ptr.hbm [resolvable:$true] %s150
          %s152 = sshll.u32 [#allocation2], 4
          %s153 = int_to_ptr.vmem [resolvable:$true] %s152
          %158 = dma.hbm_to_vmem [thread:$0]  %s151, 1024, %s153, [#allocation3], 64, 64, 4
        $region16: #{tpu_custom_call.1} parent=11 // pred_fallthru
          _
        // Predicated region
        $region17: #{tpu_custom_call.1} parent=11 // pred_check
          %p159 = pneg %p83
        $region18: #{tpu_custom_call.1} parent=11 // pred_check_branch
          %161 = sbr.rel (%p159) target = $region20
        $region19: #{tpu_custom_call.1} parent=11 // pred_region
          %163 = vsyncadd [#allocation6], 0
          %s164 = sshll.u32 %s2, 4
          %s165 = int_to_ptr.hbm [resolvable:$true] %s164
          %s166 = sshll.u32 [#allocation5], 4
          %s167 = int_to_ptr.vmem [resolvable:$true] %s166
          %172 = dma.hbm_to_vmem [thread:$0]  %s165, 2048, %s167, [#allocation6], 128, 128, 8
        $region20: #{tpu_custom_call.1} parent=11 // pred_fallthru
          _
        // Predicated region
        $region21: #{tpu_custom_call.1} parent=11 // pred_check
          %p173 = pneg %p104
        $region22: #{tpu_custom_call.1} parent=11 // pred_check_branch
          %175 = sbr.rel (%p173) target = $region24
        $region23: #{tpu_custom_call.1} parent=11 // pred_region
          _
        $region24: #{tpu_custom_call.1} parent=11 // pred_fallthru
          _
      $region12: #{tpu_custom_call.1} parent=5 // pred_fallthru
        _
      %p176 = scmp.lt.s32.totalorder %s15, 2
      // Predicated region
      $region25: #{tpu_custom_call.1} parent=5 // pred_check
        %p177 = pneg %p176
      $region26: #{tpu_custom_call.1} parent=5 // pred_check_branch
        %179 = sbr.rel (%p177) target = $region28
      $region27: #{tpu_custom_call.1} parent=5 // pred_region
        // Predicated region
        $region29: #{tpu_custom_call.1} parent=27 // pred_check
          %p180 = pneg %p35
        $region30: #{tpu_custom_call.1} parent=27 // pred_check_branch
          %182 = sbr.rel (%p180) target = $region32
        $region31: #{tpu_custom_call.1} parent=27 // pred_region
          %p183 = scmp.lt.s32.totalorder %s15, 1
          %s184 = scalar_select %p183, %s15, 1
          %s185 = smul.addr %s184, 8
          %s186 = scalar_lea.vmem %s0, %s185
        $region32: #{tpu_custom_call.1} parent=27 // pred_fallthru
          _
      $region28: #{tpu_custom_call.1} parent=5 // pred_fallthru
        _
      %p187 = scmp.le.s32.totalorder 1, %s15
      %p188 = scmp.lt.s32.totalorder %s15, 3
      %p189 = pnand %p187, %p188
      %p190 = pneg %p189
      // Predicated region
      $region33: #{tpu_custom_call.1} parent=5 // pred_check
        _
      $region34: #{tpu_custom_call.1} parent=5 // pred_check_branch
        %192 = sbr.rel (%p189) target = $region36
      $region35: #{tpu_custom_call.1} parent=5 // pred_region
        %s193 = ssub.s32 %s15, 1
        // Predicated region
        $region37: #{tpu_custom_call.1} parent=35 // pred_check
          %p194 = pneg %p62
        $region38: #{tpu_custom_call.1} parent=35 // pred_check_branch
          %196 = sbr.rel (%p194) target = $region40
        $region39: #{tpu_custom_call.1} parent=35 // pred_region
          %198 = dma.done [#allocation3], 1024
        $region40: #{tpu_custom_call.1} parent=35 // pred_fallthru
          _
        // Predicated region
        $region41: #{tpu_custom_call.1} parent=35 // pred_check
          %p199 = pneg %p83
        $region42: #{tpu_custom_call.1} parent=35 // pred_check_branch
          %201 = sbr.rel (%p199) target = $region44
        $region43: #{tpu_custom_call.1} parent=35 // pred_region
          %203 = dma.done [#allocation6], 2048
        $region44: #{tpu_custom_call.1} parent=35 // pred_fallthru
          _
        %p204 = scmp.lt.s32.totalorder %s20, 1
        %s205 = scalar_select %p204, %s20, 1
        %s206 = smul.addr %s205, 8
        %s207 = scalar_lea.vmem %s0, %s206
        %p208 = pneg %p41
        %p209 = pneg %p38
        %p210 = pneg %p62
        %p211 = pneg %p59
        %p212 = pneg %p83
        %p213 = pneg %p80
        %p214 = pneg %p104
        %p215 = pneg %p101
        %p216 = pneg %p130
        %p217 = pneg %p127
        %s218 = sand.u32 %s117, 1
        %s219 = scalar_lea.sflag [#allocation4], %s218
        %s220 = sand.u32 %s117, 1
        %s221 = smul.addr %s220, 8
        %s222 = scalar_lea.vmem [#allocation7], %s221
        %p223 = scmp.lt.s32.totalorder %s20, 1
        %s224 = scalar_select %p223, %s20, 1
        %s225 = smul.addr %s224, 8
        %s226 = scalar_lea.vmem %s0, %s225
        %v227 = vld [vmem:[%s226] sm:$0xff]
        %v228 = vlaneseq
        %v229 = vand.u32 %v228, 127
        %230 = vset.pattern.permute.xlu0 0
        %231 = vperm.xlu0 %230, %v227
        %v232 = vpop.permute.xlu0 %231
        %vm233 = vcmp.eq.s32.totalorder %v229, %v232
        %v234 = vsel %vm233, 1, 0
        %v235 = vcvt.s32.f32 %v234
        %v236 = vpack.c.bf16 %v235, %v235
        %v237 = vld [vmem:[#allocation2] sm:$0xf]
        %v238 = vld [vmem:[#allocation2 + $0x4] sm:$0xf]
        %v239 = vld [vmem:[#allocation2 + $0x8] sm:$0xf]
        %v240 = vld [vmem:[#allocation2 + $0xc] sm:$0xf]
        %v241 = vld [vmem:[#allocation2 + $0x10] sm:$0xf]
        %v242 = vld [vmem:[#allocation2 + $0x14] sm:$0xf]
        %v243 = vld [vmem:[#allocation2 + $0x18] sm:$0xf]
        %v244 = vld [vmem:[#allocation2 + $0x1c] sm:$0xf]
        %v245 = vld [vmem:[#allocation2 + $0x20] sm:$0xf]
        %v246 = vld [vmem:[#allocation2 + $0x24] sm:$0xf]
        %v247 = vld [vmem:[#allocation2 + $0x28] sm:$0xf]
        %v248 = vld [vmem:[#allocation2 + $0x2c] sm:$0xf]
        %v249 = vld [vmem:[#allocation2 + $0x30] sm:$0xf]
        %v250 = vld [vmem:[#allocation2 + $0x34] sm:$0xf]
        %v251 = vld [vmem:[#allocation2 + $0x38] sm:$0xf]
        %v252 = vld [vmem:[#allocation2 + $0x3c] sm:$0xf]
        %v269 = vunpack.c.l.b16 %v237
        %v270 = vunpack.c.l.b16 %v238
        %v271 = vunpack.c.l.b16 %v239
        %v272 = vunpack.c.l.b16 %v240
        %v273 = vunpack.c.l.b16 %v241
        %v274 = vunpack.c.l.b16 %v242
        %v275 = vunpack.c.l.b16 %v243
        %v276 = vunpack.c.l.b16 %v244
        %v277 = vunpack.c.l.b16 %v245
        %v278 = vunpack.c.l.b16 %v246
        %v279 = vunpack.c.l.b16 %v247
        %v280 = vunpack.c.l.b16 %v248
        %v281 = vunpack.c.l.b16 %v249
        %v282 = vunpack.c.l.b16 %v250
        %v283 = vunpack.c.l.b16 %v251
        %v284 = vunpack.c.l.b16 %v252
        %v285 = vpack.c.b16 %v270, %v269
        %v286 = vpack.c.b16 %v272, %v271
        %v287 = vpack.c.b16 %v274, %v273
        %v288 = vpack.c.b16 %v276, %v275
        %v289 = vpack.c.b16 %v278, %v277
        %v290 = vpack.c.b16 %v280, %v279
        %v291 = vpack.c.b16 %v282, %v281
        %v292 = vpack.c.b16 %v284, %v283
        %301 = vmatpush.bf16.msra.mxu0 %v292
        %302 = vmatpush.bf16.msra.mxu0 %v291
        %303 = vmatpush.bf16.msra.mxu0 %v290
        %304 = vmatpush.bf16.msra.mxu0 %v289
        %305 = vmatpush.bf16.msra.mxu0 %v288
        %306 = vmatpush.bf16.msra.mxu0 %v287
        %307 = vmatpush.bf16.msra.mxu0 %v286
        %308 = vmatpush.bf16.msra.mxu0 %v285
        %309 = vmatmul.bf16.gmra.mxu0 %v236
        %v310 = vpop.f32.mrf.mxu0
        %v311 = vadd.f32 0.0, %v310
        %v312 = vpop.f32.mrf.mxu0
        %313 = vdwg.mxu0
        %v314 = vpack.c.bf16 %v311, %v311
        %v315 = vld [vmem:[#allocation5] sm:$0xff]
        %v316 = vld [vmem:[#allocation5 + $0x8] sm:$0xff]
        %v317 = vld [vmem:[#allocation5 + $0x10] sm:$0xff]
        %v318 = vld [vmem:[#allocation5 + $0x18] sm:$0xff]
        %v319 = vld [vmem:[#allocation5 + $0x20] sm:$0xff]
        %v320 = vld [vmem:[#allocation5 + $0x28] sm:$0xff]
        %v321 = vld [vmem:[#allocation5 + $0x30] sm:$0xff]
        %v322 = vld [vmem:[#allocation5 + $0x38] sm:$0xff]
        %v323 = vld [vmem:[#allocation5 + $0x40] sm:$0xff]
        %v324 = vld [vmem:[#allocation5 + $0x48] sm:$0xff]
        %v325 = vld [vmem:[#allocation5 + $0x50] sm:$0xff]
        %v326 = vld [vmem:[#allocation5 + $0x58] sm:$0xff]
        %v327 = vld [vmem:[#allocation5 + $0x60] sm:$0xff]
        %v328 = vld [vmem:[#allocation5 + $0x68] sm:$0xff]
        %v329 = vld [vmem:[#allocation5 + $0x70] sm:$0xff]
        %v330 = vld [vmem:[#allocation5 + $0x78] sm:$0xff]
        %v331 = vld [vmem:[%s3] sm:$0x3]
        %v333 = vperm.slane %v331, 0
        %v334 = vperm.slane %v331, 1
        %v353 = vunpack.c.l.b16 %v315
        %v354 = vunpack.c.h.b16 %v315
        %v355 = vunpack.c.l.b16 %v316
        %v356 = vunpack.c.h.b16 %v316
        %v357 = vunpack.c.l.b16 %v317
        %v358 = vunpack.c.h.b16 %v317
        %v359 = vunpack.c.l.b16 %v318
        %v360 = vunpack.c.h.b16 %v318
        %v361 = vunpack.c.l.b16 %v319
        %v362 = vunpack.c.h.b16 %v319
        %v363 = vunpack.c.l.b16 %v320
        %v364 = vunpack.c.h.b16 %v320
        %v365 = vunpack.c.l.b16 %v321
        %v366 = vunpack.c.h.b16 %v321
        %v367 = vunpack.c.l.b16 %v322
        %v368 = vunpack.c.h.b16 %v322
        %v369 = vunpack.c.l.b16 %v323
        %v370 = vunpack.c.h.b16 %v323
        %v371 = vunpack.c.l.b16 %v324
        %v372 = vunpack.c.h.b16 %v324
        %v373 = vunpack.c.l.b16 %v325
        %v374 = vunpack.c.h.b16 %v325
        %v375 = vunpack.c.l.b16 %v326
        %v376 = vunpack.c.h.b16 %v326
        %v377 = vunpack.c.l.b16 %v327
        %v378 = vunpack.c.h.b16 %v327
        %v379 = vunpack.c.l.b16 %v328
        %v380 = vunpack.c.h.b16 %v328
        %v381 = vunpack.c.l.b16 %v329
        %v382 = vunpack.c.h.b16 %v329
        %v383 = vunpack.c.l.b16 %v330
        %v384 = vunpack.c.h.b16 %v330
        %v385 = vpack.c.b16 %v355, %v353
        %v386 = vpack.c.b16 %v356, %v354
        %v387 = vpack.c.b16 %v359, %v357
        %v388 = vpack.c.b16 %v360, %v358
        %v389 = vpack.c.b16 %v363, %v361
        %v390 = vpack.c.b16 %v364, %v362
        %v391 = vpack.c.b16 %v367, %v365
        %v392 = vpack.c.b16 %v368, %v366
        %v393 = vpack.c.b16 %v371, %v369
        %v394 = vpack.c.b16 %v372, %v370
        %v395 = vpack.c.b16 %v375, %v373
        %v396 = vpack.c.b16 %v376, %v374
        %v397 = vpack.c.b16 %v379, %v377
        %v398 = vpack.c.b16 %v380, %v378
        %v399 = vpack.c.b16 %v383, %v381
        %v400 = vpack.c.b16 %v384, %v382
        %417 = vmatpush.bf16.msra.mxu0 %v399
        %418 = vmatpush.bf16.msra.mxu0 %v397
        %419 = vmatpush.bf16.msra.mxu0 %v395
        %420 = vmatpush.bf16.msra.mxu0 %v393
        %421 = vmatpush.bf16.msra.mxu0 %v391
        %422 = vmatpush.bf16.msra.mxu0 %v389
        %423 = vmatpush.bf16.msra.mxu0 %v387
        %424 = vmatpush.bf16.msra.mxu0 %v385
        %425 = vmatmul.bf16.gmra.mxu0 %v314
        %v426 = vpop.f32.mrf.mxu0
        %v427 = vadd.f32 %v333, %v426
        %v428 = vpop.f32.mrf.mxu0
        %429 = vdwg.mxu0
        %430 = vmatpush.bf16.msra.mxu0 %v400
        %431 = vmatpush.bf16.msra.mxu0 %v398
        %432 = vmatpush.bf16.msra.mxu0 %v396
        %433 = vmatpush.bf16.msra.mxu0 %v394
        %434 = vmatpush.bf16.msra.mxu0 %v392
        %435 = vmatpush.bf16.msra.mxu0 %v390
        %436 = vmatpush.bf16.msra.mxu0 %v388
        %437 = vmatpush.bf16.msra.mxu0 %v386
        %438 = vmatmul.bf16.gmra.mxu0 %v314
        %v439 = vpop.f32.mrf.mxu0
        %v440 = vadd.f32 %v334, %v439
        %v441 = vpop.f32.mrf.mxu0
        %442 = vdwg.mxu0
        %v443 = vxor.u32 %v427, 2147483648
        %v444 = vmul.f32 %v443, 1.442695
        %v445 = vpow.pop %v444
        %v446 = vadd.f32 %v445, 1.0
        %v447 = vrcp.pop %v446
        %v448 = vmul.f32 %v446, %v447
        %v449 = vsub.f32 1.0, %v448
        %v450 = vmul.f32 %v447, %v449
        %v451 = vadd.f32 %v447, %v450
        %vm452 = vweird.f32 %v446
        %vm453 = vweird.f32 %v447
        %vm454 = vmor %vm452, %vm453
        %v455 = vsel %vm454, %v447, %v451
        %v456 = vand.u32 2147483647, %v446
        %vm457 = vcmp.eq.f32.partialorder %v456, 8.507059e+37
        %v458 = vand.u32 %v446, 2147483648
        %v459 = vor.u32 1.1754944e-38, %v458
        %v460 = vsel %vm457, %v459, %v455
        %v461 = vmul.f32 1.0, %v460
        %v462 = vtanh.pop %v440
        %v463 = vmul.f32 %v461, %v462
        %464 = vst [vmem:[%s222] sm:$0xff] %v463
        %s465 = sand.u32 %s117, 1
        %s466 = scalar_lea.sflag [#allocation4], %s465
        %s467 = sand.u32 %s117, 1
        %s468 = smul.addr %s467, 8
        %s469 = scalar_lea.vmem [#allocation7], %s468
        // Predicated region
        $region45: #{tpu_custom_call.1} parent=35 // pred_check
          %p470 = pneg %p127
        $region46: #{tpu_custom_call.1} parent=35 // pred_check_branch
          %472 = sbr.rel (%p470) target = $region48
        $region47: #{tpu_custom_call.1} parent=35 // pred_region
          %474 = vsyncadd %s466, 0
          %s475 = smul.addr %s20, 8
          %s476 = scalar_lea.hbm %s4, %s475
          %s478 = sshll.u32 %s469, 4
          %s479 = int_to_ptr.vmem [resolvable:$true] %s478
          %s480 = sshll.u32 %s476, 4
          %s481 = int_to_ptr.hbm [resolvable:$true] %s480
          %483 = dma.vmem_to_hbm [thread:$0]  %s479, 128, %s481, %s466
        $region48: #{tpu_custom_call.1} parent=35 // pred_fallthru
          _
      $region36: #{tpu_custom_call.1} parent=5 // pred_fallthru
        _
      %p484 = scmp.le.s32.totalorder 2, %s15
      // Predicated region
      $region49: #{tpu_custom_call.1} parent=5 // pred_check
        %p485 = pneg %p484
      $region50: #{tpu_custom_call.1} parent=5 // pred_check_branch
        %487 = sbr.rel (%p485) target = $region52
      $region51: #{tpu_custom_call.1} parent=5 // pred_region
        %s488 = ssub.s32 %s15, 2
        // Predicated region
        $region53: #{tpu_custom_call.1} parent=51 // pred_check
          %p489 = pneg %p133
        $region54: #{tpu_custom_call.1} parent=51 // pred_check_branch
          %491 = sbr.rel (%p489) target = $region56
        $region55: #{tpu_custom_call.1} parent=51 // pred_region
          %s492 = sand.u32 %s118, 1
          %s493 = scalar_lea.sflag [#allocation4], %s492
          %s494 = sand.u32 %s118, 1
          %s495 = smul.addr %s494, 8
          %s496 = scalar_lea.vmem [#allocation7], %s495
          %498 = dma.done %s493, 128
        $region56: #{tpu_custom_call.1} parent=51 // pred_fallthru
          _
      $region52: #{tpu_custom_call.1} parent=5 // pred_fallthru
        _
    $region6: #{tpu_custom_call.1} parent=1 // loop_footer
      %s19 = sadd.s32 1, %s15
    $region7: #{tpu_custom_call.1} parent=1 // loop_footer_branch
      %14 = sbr.rel target = $region3
    $region8: #{tpu_custom_call.1} parent=1 // loop_exit
      _
    %499 = vsyncpa [#allocation3], 1
    %s500 = scalar_lea.sflag [#allocation3], 1
    %501 = vsyncpa %s500, 1
    %502 = vsyncpa [#allocation6], 1
    %503 = vsyncpa [#allocation4], 1
    %s504 = scalar_lea.sflag [#allocation4], 1
    %505 = vsyncpa %s504, 1

</llo_original>
